<compile_context>
chip_gen: v5e
topology: v5e:2x2
jax: 0.10.0
libtpu: 0.0.40
codegen_flags: <defaults>
</compile_context>

<pallas_src>
import jax
import jax.numpy as jnp
from jax.experimental import pallas as pl
from jax.experimental.pallas import tpu as pltpu


# ----------------------------------------------------------------------------
# Kernel
# ----------------------------------------------------------------------------
def _mlp_kernel(x_ref, w0_ref, b0_ref, w1_ref, b1_ref, w2_ref, b2_ref, o_ref):
    """Fused 3-layer MLP on one batch tile (CancelOut pre-folded into W0)."""
    wdt = w0_ref.dtype                       # f32 or bf16 weight storage
    x = x_ref[...].astype(wdt)

    # Layer 0: Linear + ReLU   (Dropout == identity in eval mode)
    h = jnp.dot(x, w0_ref[...], preferred_element_type=jnp.float32)
    h = jnp.maximum(h + b0_ref[...], 0.0)

    # Layer 1: Linear + ReLU
    h = jnp.dot(h.astype(wdt), w1_ref[...], preferred_element_type=jnp.float32)
    h = jnp.maximum(h + b1_ref[...], 0.0)

    # Layer 2 (final): Linear only, written lane-dense (padded N).
    o = jnp.dot(h.astype(wdt), w2_ref[...], preferred_element_type=jnp.float32)
    o_ref[...] = (o + b2_ref[...]).astype(o_ref.dtype)


# ----------------------------------------------------------------------------
# Parameter prep
# ----------------------------------------------------------------------------
def prepare_kernel_params(params, weights_dtype=jnp.float32):
    """One-time parameter transform for the kernel.

    - Folds the CancelOut gate into W0:  (x * g) @ W0 == x @ (g^T * W0).
    - Zero-pads W2 / b2 along the output-feature axis up to a multiple of 128
      so the kernel's output store is lane-dense (unmasked vst).
    - Optionally stores weights in bf16 (f32 accumulation stays in-kernel);
      biases remain f32.
    """
    input_size, hidden = params["w0"].shape
    out_size = params["w2"].shape[1]
    n_pad = ((out_size + 127) // 128) * 128

    gate = jax.nn.sigmoid(params["cancelout"]).reshape(input_size, 1)
    w0 = params["w0"] * gate                                   # fold CancelOut

    w2 = jnp.zeros((hidden, n_pad), jnp.float32).at[:, :out_size].set(params["w2"])
    b2 = jnp.zeros((1, n_pad), jnp.float32).at[:, :out_size].set(params["b2"])

    return {
        "w0": w0.astype(weights_dtype), "b0": params["b0"].astype(jnp.float32),
        "w1": params["w1"].astype(weights_dtype), "b1": params["b1"].astype(jnp.float32),
        "w2": w2.astype(weights_dtype), "b2": b2,
        "out_size": out_size,
    }


# ----------------------------------------------------------------------------
# Wrapper
# ----------------------------------------------------------------------------
def _round_up(x, m):
    return ((x + m - 1) // m) * m


def _choose_tile_b(B):
    """8-row-aligned batch tile; >=2 grid steps when B permits (v7x: 2 TCs)."""
    cap = 2048
    if B <= 8:
        return 8
    half = _round_up(pl.cdiv(B, 2), 8)
    return min(half, cap)


def parametrized_net_forward(x, kparams, *, tile_b=None):
    """x: [B, input_size] float32. kparams: output of prepare_kernel_params."""
    B, input_size = x.shape
    hidden = kparams["w0"].shape[1]
    n_pad = kparams["w2"].shape[1]
    out_size = kparams["out_size"]

    if tile_b is None:
        tile_b = _choose_tile_b(B)
    tile_b = _round_up(tile_b, 8)

    # Pad the batch up to a multiple of tile_b (no awkward-B divisor fallback).
    B_pad = _round_up(B, tile_b)
    if B_pad != B:
        x = jnp.pad(x, ((0, B_pad - B), (0, 0)))
    grid = (B_pad // tile_b,)

    def resident_spec(shape):
        # Whole-array block, resident across the batch grid axis; constant
        # index_map => single pipeline buffer (no VMEM wasted on a 2nd copy).
        return pl.BlockSpec(shape, lambda i: tuple(0 for _ in shape),
                            pipeline_mode=pl.Buffered(1))

    # VMEM budget: double-buffered x/out tiles + single-buffered weights.
    w_itemsize = jnp.dtype(kparams["w0"].dtype).itemsize
    x_tile_bytes = tile_b * input_size * 4
    out_tile_bytes = tile_b * n_pad * 4
    weight_bytes = (input_size * hidden + hidden * hidden + hidden * n_pad) * w_itemsize
    bias_bytes = (hidden + hidden + n_pad) * 4
    vmem_needed = 2 * x_tile_bytes + 2 * out_tile_bytes + weight_bytes + bias_bytes
    vmem_limit = int(min(max(vmem_needed + (4 << 20), 16 << 20), 100 << 20))

    flops = 2 * B_pad * (input_size * hidden + hidden * hidden + hidden * n_pad)
    bytes_accessed = (B_pad * input_size * 4 + B_pad * n_pad * 4
                      + weight_bytes + bias_bytes)

    out_padded = pl.pallas_call(
        _mlp_kernel,
        out_shape=jax.ShapeDtypeStruct((B_pad, n_pad), jnp.float32),
        grid=grid,
        in_specs=[
            pl.BlockSpec((tile_b, input_size), lambda i: (i, 0)),   # x tile
            resident_spec((input_size, hidden)),                    # W0 (gated)
            resident_spec((1, hidden)),                             # b0
            resident_spec((hidden, hidden)),                        # W1
            resident_spec((1, hidden)),                             # b1
            resident_spec((hidden, n_pad)),                         # W2 (padded)
            resident_spec((1, n_pad)),                              # b2 (padded)
        ],
        out_specs=pl.BlockSpec((tile_b, n_pad), lambda i: (i, 0)),
        compiler_params=pltpu.CompilerParams(
            dimension_semantics=("parallel",),
            vmem_limit_bytes=vmem_limit),
        cost_estimate=pl.CostEstimate(
            flops=flops, transcendentals=0, bytes_accessed=bytes_accessed),
    )(x,
      kparams["w0"], kparams["b0"],
      kparams["w1"], kparams["b1"],
      kparams["w2"], kparams["b2"])

    # NOTE: consumers that can take the padded [B_pad, n_pad] buffer directly
    # should do so to avoid this extra HBM pass.
    return out_padded[:B, :out_size]


# ----------------------------------------------------------------------------
# Reference + init
# ----------------------------------------------------------------------------
def init_params(key, input_size, hidden_size, output_size):
    """Deterministic parameter init mirroring the module's __init__ shapes.

    CancelOut.weights = zeros(input_size) (as in the PyTorch module).
    Linear weights use a simple uniform(-1/sqrt(in), 1/sqrt(in)) init,
    stored transposed as [in, out].
    """
    k0, k1, k2, k3, k4, k5 = jax.random.split(key, 6)

    def linear(kw, kb, fan_in, fan_out):
        bound = 1.0 / jnp.sqrt(fan_in)
        w = jax.random.uniform(kw, (fan_in, fan_out), jnp.float32, -bound, bound)
        b = jax.random.uniform(kb, (1, fan_out), jnp.float32, -bound, bound)
        return w, b

    w0, b0 = linear(k0, k1, input_size, hidden_size)
    w1, b1 = linear(k2, k3, hidden_size, hidden_size)
    w2, b2 = linear(k4, k5, hidden_size, output_size)
    return {
        "cancelout": jnp.zeros((1, input_size), jnp.float32),
        "w0": w0, "b0": b0,
        "w1": w1, "b1": b1,
        "w2": w2, "b2": b2,
    }


def reference_forward(x, params):
    """Pure-JAX reference (un-folded, un-padded) for correctness checking."""
    h = x * jax.nn.sigmoid(params["cancelout"])
    h = jnp.maximum(h @ params["w0"] + params["b0"], 0.0)
    h = jnp.maximum(h @ params["w1"] + params["b1"], 0.0)
    return h @ params["w2"] + params["b2"]


# ----------------------------------------------------------------------------
# Main
# ----------------------------------------------------------------------------
if __name__ == "__main__":
    # Small shapes consistent with the module: num_layers=3, input=16,
    # hidden=32, output=4, use_cancelout=True, batch=16.
    B, input_size, hidden_size, output_size = 16, 16, 32, 4

    key = jax.random.PRNGKey(0)
    kx, kp, kx2 = jax.random.split(key, 3)
    x = jax.random.normal(kx, (B, input_size), jnp.float32)
    params = init_params(kp, input_size, hidden_size, output_size)
    ref = reference_forward(x, params)

    # f32-weight path (strict tolerance).
    kparams32 = prepare_kernel_params(params, weights_dtype=jnp.float32)
    out32 = jax.block_until_ready(parametrized_net_forward(x, kparams32))
    assert out32.shape == (B, output_size)
    assert jnp.allclose(out32, ref, atol=1e-5, rtol=1e-5), "f32 mismatch vs reference"

    # bf16-weight path (f32 accumulation; looser tolerance).
    kparams_bf16 = prepare_kernel_params(params, weights_dtype=jnp.bfloat16)
    out_bf = jax.block_until_ready(parametrized_net_forward(x, kparams_bf16))
    assert out_bf.shape == (B, output_size)
    assert jnp.allclose(out_bf, ref, atol=5e-2, rtol=5e-2), "bf16 mismatch vs reference"

    # Awkward (non-multiple-of-8) batch exercises the pad-and-slice tiling path.
    B2 = 37
    x2 = jax.random.normal(kx2, (B2, input_size), jnp.float32)
    ref2 = reference_forward(x2, params)
    out2 = jax.block_until_ready(parametrized_net_forward(x2, kparams32))
    assert out2.shape == (B2, output_size)
    assert jnp.allclose(out2, ref2, atol=1e-5, rtol=1e-5), "padded-B mismatch vs reference"

    print("KERNEL_OK")
</pallas_src>

<mosaic_0001>
module attributes {stable_mosaic.version = 11 : i64} {
  func.func @_mlp_kernel(%arg0: i32, %arg1: memref<8x16xf32, #tpu.memory_space<vmem>>, %arg2: memref<16x32xf32, #tpu.memory_space<vmem>>, %arg3: memref<1x32xf32, #tpu.memory_space<vmem>>, %arg4: memref<32x32xf32, #tpu.memory_space<vmem>>, %arg5: memref<1x32xf32, #tpu.memory_space<vmem>>, %arg6: memref<32x128xf32, #tpu.memory_space<vmem>>, %arg7: memref<1x128xf32, #tpu.memory_space<vmem>>, %arg8: memref<8x128xf32, #tpu.memory_space<vmem>>) attributes {dimension_semantics = [#tpu.dimension_semantics<parallel>], iteration_bounds = array<i64: 2>, scalar_prefetch = 0 : i64, scratch_operands = 0 : i64, tpu.core_type = #tpu.core_type<tc>, window_params = [{transform_indices = @transform_0, window_bounds = array<i64: 8, 16>}, {pipeline_mode = #tpu.pipeline_mode<synchronous>, transform_indices = @transform_1, window_bounds = array<i64: 16, 32>}, {pipeline_mode = #tpu.pipeline_mode<synchronous>, transform_indices = @transform_2, window_bounds = array<i64: 1, 32>}, {pipeline_mode = #tpu.pipeline_mode<synchronous>, transform_indices = @transform_3, window_bounds = array<i64: 32, 32>}, {pipeline_mode = #tpu.pipeline_mode<synchronous>, transform_indices = @transform_4, window_bounds = array<i64: 1, 32>}, {pipeline_mode = #tpu.pipeline_mode<synchronous>, transform_indices = @transform_5, window_bounds = array<i64: 32, 128>}, {pipeline_mode = #tpu.pipeline_mode<synchronous>, transform_indices = @transform_6, window_bounds = array<i64: 1, 128>}, {transform_indices = @transform_7, window_bounds = array<i64: 8, 128>}]} {
    %c0 = arith.constant 0 : index
    %c0_0 = arith.constant 0 : index
    %0 = vector.load %arg1[%c0, %c0_0] : memref<8x16xf32, #tpu.memory_space<vmem>>, vector<8x16xf32>
    %c0_1 = arith.constant 0 : index
    %c0_2 = arith.constant 0 : index
    %1 = vector.load %arg2[%c0_1, %c0_2] : memref<16x32xf32, #tpu.memory_space<vmem>>, vector<16x32xf32>
    %cst = arith.constant dense<0.000000e+00> : vector<8x32xf32>
    %2 = tpu.matmul %0, %1, %cst {dimension_numbers = #tpu.dot_dimension_numbers<[1], [0], [0], [1], [0, 0, 1, 1], [], []>} : vector<8x16xf32>, vector<16x32xf32>, vector<8x32xf32> -> vector<8x32xf32>
    %c0_3 = arith.constant 0 : index
    %c0_4 = arith.constant 0 : index
    %3 = vector.load %arg3[%c0_3, %c0_4] : memref<1x32xf32, #tpu.memory_space<vmem>>, vector<1x32xf32>
    %4 = vector.broadcast %3 : vector<1x32xf32> to vector<8x32xf32>
    %5 = arith.addf %2, %4 : vector<8x32xf32>
    %cst_5 = arith.constant 0.000000e+00 : f32
    %6 = vector.broadcast %cst_5 : f32 to vector<8x32xf32>
    %7 = arith.maximumf %5, %6 : vector<8x32xf32>
    %c0_6 = arith.constant 0 : index
    %c0_7 = arith.constant 0 : index
    %8 = vector.load %arg4[%c0_6, %c0_7] : memref<32x32xf32, #tpu.memory_space<vmem>>, vector<32x32xf32>
    %cst_8 = arith.constant dense<0.000000e+00> : vector<8x32xf32>
    %9 = tpu.matmul %7, %8, %cst_8 {dimension_numbers = #tpu.dot_dimension_numbers<[1], [0], [0], [1], [0, 0, 1, 1], [], []>} : vector<8x32xf32>, vector<32x32xf32>, vector<8x32xf32> -> vector<8x32xf32>
    %c0_9 = arith.constant 0 : index
    %c0_10 = arith.constant 0 : index
    %10 = vector.load %arg5[%c0_9, %c0_10] : memref<1x32xf32, #tpu.memory_space<vmem>>, vector<1x32xf32>
    %11 = vector.broadcast %10 : vector<1x32xf32> to vector<8x32xf32>
    %12 = arith.addf %9, %11 : vector<8x32xf32>
    %cst_11 = arith.constant 0.000000e+00 : f32
    %13 = vector.broadcast %cst_11 : f32 to vector<8x32xf32>
    %14 = arith.maximumf %12, %13 : vector<8x32xf32>
    %c0_12 = arith.constant 0 : index
    %c0_13 = arith.constant 0 : index
    %15 = vector.load %arg6[%c0_12, %c0_13] : memref<32x128xf32, #tpu.memory_space<vmem>>, vector<32x128xf32>
    %cst_14 = arith.constant dense<0.000000e+00> : vector<8x128xf32>
    %16 = tpu.matmul %14, %15, %cst_14 {dimension_numbers = #tpu.dot_dimension_numbers<[1], [0], [0], [1], [0, 0, 1, 1], [], []>} : vector<8x32xf32>, vector<32x128xf32>, vector<8x128xf32> -> vector<8x128xf32>
    %c0_15 = arith.constant 0 : index
    %c0_16 = arith.constant 0 : index
    %17 = vector.load %arg7[%c0_15, %c0_16] : memref<1x128xf32, #tpu.memory_space<vmem>>, vector<1x128xf32>
    %18 = vector.broadcast %17 : vector<1x128xf32> to vector<8x128xf32>
    %19 = arith.addf %16, %18 : vector<8x128xf32>
    %c0_17 = arith.constant 0 : index
    %c0_18 = arith.constant 0 : index
    %20 = vector.load %arg8[%c0_17, %c0_18] : memref<8x128xf32, #tpu.memory_space<vmem>>, vector<8x128xf32>
    tpu.vector_store %arg8[%c0_17, %c0_18], %19 {strides = array<i32>} : memref<8x128xf32, #tpu.memory_space<vmem>>, vector<8x128xf32>,
    return
  }
  func.func @transform_0(%arg0: i32) -> (i32, i32) {
    %c0_i32 = arith.constant 0 : i32
    %c0_i32_0 = arith.constant 0 : i32
    return %arg0, %c0_i32 : i32, i32
  }
  func.func @transform_1(%arg0: i32) -> (i32, i32) {
    %c0_i32 = arith.constant 0 : i32
    %c0_i32_0 = arith.constant 0 : i32
    %c0_i32_1 = arith.constant 0 : i32
    return %c0_i32, %c0_i32_0 : i32, i32
  }
  func.func @transform_2(%arg0: i32) -> (i32, i32) {
    %c0_i32 = arith.constant 0 : i32
    %c0_i32_0 = arith.constant 0 : i32
    %c0_i32_1 = arith.constant 0 : i32
    return %c0_i32, %c0_i32_0 : i32, i32
  }
  func.func @transform_3(%arg0: i32) -> (i32, i32) {
    %c0_i32 = arith.constant 0 : i32
    %c0_i32_0 = arith.constant 0 : i32
    %c0_i32_1 = arith.constant 0 : i32
    return %c0_i32, %c0_i32_0 : i32, i32
  }
  func.func @transform_4(%arg0: i32) -> (i32, i32) {
    %c0_i32 = arith.constant 0 : i32
    %c0_i32_0 = arith.constant 0 : i32
    %c0_i32_1 = arith.constant 0 : i32
    return %c0_i32, %c0_i32_0 : i32, i32
  }
  func.func @transform_5(%arg0: i32) -> (i32, i32) {
    %c0_i32 = arith.constant 0 : i32
    %c0_i32_0 = arith.constant 0 : i32
    %c0_i32_1 = arith.constant 0 : i32
    return %c0_i32, %c0_i32_0 : i32, i32
  }
  func.func @transform_6(%arg0: i32) -> (i32, i32) {
    %c0_i32 = arith.constant 0 : i32
    %c0_i32_0 = arith.constant 0 : i32
    %c0_i32_1 = arith.constant 0 : i32
    return %c0_i32, %c0_i32_0 : i32, i32
  }
  func.func @transform_7(%arg0: i32) -> (i32, i32) {
    %c0_i32 = arith.constant 0 : i32
    %c0_i32_0 = arith.constant 0 : i32
    return %arg0, %c0_i32 : i32, i32
  }
}

</mosaic_0001>

<llo_original>
// kernel: tpu_custom_call.1
$region0: #{tpu_custom_call.1}
  #allocation0 [shape = 'u32[]', space=smem, size = 0x4, offset = 0x4, fixed_abs, tag = 'smem constant byte address 0x4 - core index']
  #allocation1 [shape = 'u32[72,128]{1,0:T(1,128)}', space=vmem, size = 0x9000, scoped, tag = 'internal scratch']
  %s0 = inlined_call_operand.hbm [shape: f32[16,16], index: 0, kind: input, shape index: {}]
  %s1 = inlined_call_operand.hbm [shape: f32[16,32], index: 1, kind: input, shape index: {}]
  %s2 = inlined_call_operand.vmem [shape: f32[1,32], index: 2, kind: input, shape index: {}]
  %s3 = inlined_call_operand.hbm [shape: f32[32,32], index: 3, kind: input, shape index: {}]
  %s4 = inlined_call_operand.vmem [shape: f32[1,32], index: 4, kind: input, shape index: {}]
  %s5 = inlined_call_operand.hbm [shape: f32[32,128], index: 5, kind: input, shape index: {}]
  %s6 = inlined_call_operand.vmem [shape: f32[1,128], index: 6, kind: input, shape index: {}]
  %s7 = inlined_call_operand.hbm [shape: f32[16,128], index: 7, kind: output, shape index: {}]
  %s8 = sld [smem:[#allocation0]]
  $region77: #{tpu_custom_call.1} parent=0
    _
  %s10 = ssub.s32 1, %s8
  %s11 = scalar_select 0, %s10, %s8
  $region1: #{tpu_custom_call.1} parent=0
    #allocation2 [shape = 'u8[8192]{0}', space=vmem, size = 0x2000, scoped, tag = 'input window, operand 0']
    #allocation3 [shape = 's32[2]{0}', space=sflag, size = 0x8, scoped, tag = 'scoped memory for tpu_custom_call.1']
    #allocation4 [shape = 's32[2]{0}', space=sflag, size = 0x8, scoped, tag = 'scoped memory for tpu_custom_call.1']
    #allocation5 [shape = 'u8[8192]{0}', space=vmem, size = 0x2000, scoped, tag = 'input window, operand 1, single buffered']
    #allocation6 [shape = 's32[1]{0}', space=sflag, size = 0x4, scoped, tag = 'scoped memory for tpu_custom_call.1']
    #allocation7 [shape = 'u8[16384]{0}', space=vmem, size = 0x4000, scoped, tag = 'input window, operand 3, single buffered']
    #allocation8 [shape = 'u8[16384]{0}', space=vmem, size = 0x4000, scoped, tag = 'input window, operand 5, single buffered']
    #allocation9 [shape = 's32[1]{0}', space=sflag, size = 0x4, scoped, tag = 'scoped memory for tpu_custom_call.1']
    #allocation10 [shape = 'u8[8192]{0}', space=vmem, size = 0x2000, scoped, tag = 'output window, operand 0']
    %12 = vsyncpa [#allocation3], 0
    %s13 = scalar_lea.sflag [#allocation3], 1
    %14 = vsyncpa %s13, 0
    %15 = vsyncpa [#allocation6], 0
    %16 = vsyncpa [#allocation9], 0
    %17 = vsyncpa [#allocation4], 0
    %s18 = scalar_lea.sflag [#allocation4], 1
    %19 = vsyncpa %s18, 0
    loop: start=0, step=1, limit=4
    $region2: #{tpu_custom_call.1} parent=1 // loop_pre_header
      _
    $region3: #{tpu_custom_call.1} parent=1 // loop_header
      %s21 = sphi 0, %s25
      %p22 = scmp.ge.s32.totalorder %s21, 4
      %s31 = sphi 0, %s33
      %s34 = sphi 0, %s31
      %s35 = sphi 0, %s34
      %s51 = sphi 0, %s35
      %s55 = sphi 0, %s55
      %s57 = sphi 0, %s55
      %s58 = sphi 0, %s57
      %s72 = sphi 0, %s58
      %s76 = sphi 0, %s76
      %s78 = sphi 0, %s76
      %s79 = sphi 0, %s78
      %s93 = sphi 0, %s79
      %s97 = sphi 0, %s97
      %s99 = sphi 0, %s97
      %s100 = sphi 0, %s99
      %s114 = sphi 0, %s100
      %s118 = sphi 0, %s118
      %s120 = sphi 0, %s118
      %s121 = sphi 0, %s120
      %s135 = sphi 0, %s121
      %s139 = sphi 0, %s139
      %s141 = sphi 0, %s139
      %s142 = sphi 0, %s141
      %s156 = sphi 0, %s142
      %s160 = sphi 0, %s160
      %s162 = sphi 0, %s160
      %s163 = sphi 0, %s162
      %s177 = sphi 0, %s163
      %s183 = sphi 0, %s185
      %s186 = sphi 0, %s183
      %s187 = sphi 0, %s186
      %s203 = sphi 0, %s187
    $region4: #{tpu_custom_call.1} parent=1 // loop_header_branch
      %24 = sbr.rel (%p22) target = $region8
    $region5: #{tpu_custom_call.1} parent=1 // loop_body
      %s26 = ssub.s32 %s21, 1
      %s27 = ssub.s32 %s21, 2
      %s28 = sadd.s32 %s21, 1
      %s29 = ssub.s32 %s21, %s28
      %p30 = scmp.eq.s32.totalorder %s29, 0
      %s32 = sadd.s32 %s31, 1
      %s33 = scalar_select %p30, %s31, %s32
      %p36 = pneg %p30
      %p37 = scmp.eq.s32.totalorder %s21, 1
      %p38 = por %p36, %p37
      %p39 = scmp.ne.s32.totalorder %s31, %s34
      %p40 = scmp.eq.s32.totalorder %s21, 0
      %p41 = por %p39, %p40
      %p42 = scmp.ne.s32.totalorder %s31, %s34
      %p43 = scmp.eq.s32.totalorder %s26, 1
      %p44 = por %p42, %p43
      %p45 = scmp.ne.s32.totalorder %s34, %s35
      %p46 = scmp.eq.s32.totalorder %s26, 0
      %p47 = por %p45, %p46
      %p48 = scmp.ne.s32.totalorder %s34, %s35
      %p49 = scmp.eq.s32.totalorder %s27, 1
      %p50 = por %p48, %p49
      %p52 = scmp.ne.s32.totalorder %s35, %s51
      %p53 = scmp.eq.s32.totalorder %s27, 0
      %p54 = por %p52, %p53
      %s56 = sadd.s32 %s55, 1
      %p59 = scmp.eq.s32.totalorder %s21, 1
      %p60 = scmp.ne.s32.totalorder %s55, %s57
      %p61 = scmp.eq.s32.totalorder %s21, 0
      %p62 = por %p60, %p61
      %p63 = scmp.ne.s32.totalorder %s55, %s57
      %p64 = scmp.eq.s32.totalorder %s26, 1
      %p65 = por %p63, %p64
      %p66 = scmp.ne.s32.totalorder %s57, %s58
      %p67 = scmp.eq.s32.totalorder %s26, 0
      %p68 = por %p66, %p67
      %p69 = scmp.ne.s32.totalorder %s57, %s58
      %p70 = scmp.eq.s32.totalorder %s27, 1
      %p71 = por %p69, %p70
      %p73 = scmp.ne.s32.totalorder %s58, %s72
      %p74 = scmp.eq.s32.totalorder %s27, 0
      %p75 = por %p73, %p74
      %s77 = sadd.s32 %s76, 1
      %p80 = scmp.eq.s32.totalorder %s21, 1
      %p81 = scmp.ne.s32.totalorder %s76, %s78
      %p82 = scmp.eq.s32.totalorder %s21, 0
      %p83 = por %p81, %p82
      %p84 = scmp.ne.s32.totalorder %s76, %s78
      %p85 = scmp.eq.s32.totalorder %s26, 1
      %p86 = por %p84, %p85
      %p87 = scmp.ne.s32.totalorder %s78, %s79
      %p88 = scmp.eq.s32.totalorder %s26, 0
      %p89 = por %p87, %p88
      %p90 = scmp.ne.s32.totalorder %s78, %s79
      %p91 = scmp.eq.s32.totalorder %s27, 1
      %p92 = por %p90, %p91
      %p94 = scmp.ne.s32.totalorder %s79, %s93
      %p95 = scmp.eq.s32.totalorder %s27, 0
      %p96 = por %p94, %p95
      %s98 = sadd.s32 %s97, 1
      %p101 = scmp.eq.s32.totalorder %s21, 1
      %p102 = scmp.ne.s32.totalorder %s97, %s99
      %p103 = scmp.eq.s32.totalorder %s21, 0
      %p104 = por %p102, %p103
      %p105 = scmp.ne.s32.totalorder %s97, %s99
      %p106 = scmp.eq.s32.totalorder %s26, 1
      %p107 = por %p105, %p106
      %p108 = scmp.ne.s32.totalorder %s99, %s100
      %p109 = scmp.eq.s32.totalorder %s26, 0
      %p110 = por %p108, %p109
      %p111 = scmp.ne.s32.totalorder %s99, %s100
      %p112 = scmp.eq.s32.totalorder %s27, 1
      %p113 = por %p111, %p112
      %p115 = scmp.ne.s32.totalorder %s100, %s114
      %p116 = scmp.eq.s32.totalorder %s27, 0
      %p117 = por %p115, %p116
      %s119 = sadd.s32 %s118, 1
      %p122 = scmp.eq.s32.totalorder %s21, 1
      %p123 = scmp.ne.s32.totalorder %s118, %s120
      %p124 = scmp.eq.s32.totalorder %s21, 0
      %p125 = por %p123, %p124
      %p126 = scmp.ne.s32.totalorder %s118, %s120
      %p127 = scmp.eq.s32.totalorder %s26, 1
      %p128 = por %p126, %p127
      %p129 = scmp.ne.s32.totalorder %s120, %s121
      %p130 = scmp.eq.s32.totalorder %s26, 0
      %p131 = por %p129, %p130
      %p132 = scmp.ne.s32.totalorder %s120, %s121
      %p133 = scmp.eq.s32.totalorder %s27, 1
      %p134 = por %p132, %p133
      %p136 = scmp.ne.s32.totalorder %s121, %s135
      %p137 = scmp.eq.s32.totalorder %s27, 0
      %p138 = por %p136, %p137
      %s140 = sadd.s32 %s139, 1
      %p143 = scmp.eq.s32.totalorder %s21, 1
      %p144 = scmp.ne.s32.totalorder %s139, %s141
      %p145 = scmp.eq.s32.totalorder %s21, 0
      %p146 = por %p144, %p145
      %p147 = scmp.ne.s32.totalorder %s139, %s141
      %p148 = scmp.eq.s32.totalorder %s26, 1
      %p149 = por %p147, %p148
      %p150 = scmp.ne.s32.totalorder %s141, %s142
      %p151 = scmp.eq.s32.totalorder %s26, 0
      %p152 = por %p150, %p151
      %p153 = scmp.ne.s32.totalorder %s141, %s142
      %p154 = scmp.eq.s32.totalorder %s27, 1
      %p155 = por %p153, %p154
      %p157 = scmp.ne.s32.totalorder %s142, %s156
      %p158 = scmp.eq.s32.totalorder %s27, 0
      %p159 = por %p157, %p158
      %s161 = sadd.s32 %s160, 1
      %p164 = scmp.eq.s32.totalorder %s21, 1
      %p165 = scmp.ne.s32.totalorder %s160, %s162
      %p166 = scmp.eq.s32.totalorder %s21, 0
      %p167 = por %p165, %p166
      %p168 = scmp.ne.s32.totalorder %s160, %s162
      %p169 = scmp.eq.s32.totalorder %s26, 1
      %p170 = por %p168, %p169
      %p171 = scmp.ne.s32.totalorder %s162, %s163
      %p172 = scmp.eq.s32.totalorder %s26, 0
      %p173 = por %p171, %p172
      %p174 = scmp.ne.s32.totalorder %s162, %s163
      %p175 = scmp.eq.s32.totalorder %s27, 1
      %p176 = por %p174, %p175
      %p178 = scmp.ne.s32.totalorder %s163, %s177
      %p179 = scmp.eq.s32.totalorder %s27, 0
      %p180 = por %p178, %p179
      %s181 = ssub.s32 %s21, %s28
      %p182 = scmp.eq.s32.totalorder %s181, 0
      %s184 = sadd.s32 %s183, 1
      %s185 = scalar_select %p182, %s183, %s184
      %p188 = pneg %p182
      %p189 = scmp.eq.s32.totalorder %s21, 1
      %p190 = por %p188, %p189
      %p191 = scmp.ne.s32.totalorder %s183, %s186
      %p192 = scmp.eq.s32.totalorder %s21, 0
      %p193 = por %p191, %p192
      %p194 = scmp.ne.s32.totalorder %s183, %s186
      %p195 = scmp.eq.s32.totalorder %s26, 1
      %p196 = por %p194, %p195
      %p197 = scmp.ne.s32.totalorder %s186, %s187
      %p198 = scmp.eq.s32.totalorder %s26, 0
      %p199 = por %p197, %p198
      %p200 = scmp.ne.s32.totalorder %s186, %s187
      %p201 = scmp.eq.s32.totalorder %s27, 1
      %p202 = por %p200, %p201
      %p204 = scmp.ne.s32.totalorder %s187, %s203
      %p205 = scmp.eq.s32.totalorder %s27, 0
      %p206 = por %p204, %p205
      %p207 = scmp.le.s32.totalorder 1, %s21
      %p208 = scmp.lt.s32.totalorder %s21, 3
      %p209 = pnand %p207, %p208
      %p210 = pneg %p209
      // Predicated region
      $region9: #{tpu_custom_call.1} parent=5 // pred_check
        _
      $region10: #{tpu_custom_call.1} parent=5 // pred_check_branch
        %212 = sbr.rel (%p209) target = $region12
      $region11: #{tpu_custom_call.1} parent=5 // pred_region
        %s213 = ssub.s32 %s21, 1
        // Predicated region
        $region13: #{tpu_custom_call.1} parent=11 // pred_check
          %p214 = pneg %p68
        $region14: #{tpu_custom_call.1} parent=11 // pred_check_branch
          %216 = sbr.rel (%p214) target = $region16
        $region15: #{tpu_custom_call.1} parent=11 // pred_region
          %218 = vsyncadd [#allocation6], 0
          %s219 = sshll.u32 %s1, 4
          %s220 = int_to_ptr.hbm [resolvable:$true] %s219
          %s221 = sshll.u32 [#allocation5], 4
          %s222 = int_to_ptr.vmem [resolvable:$true] %s221
          %227 = dma.hbm_to_vmem [thread:$0]  %s220, 256, %s222, [#allocation6], 128, 128, 8
        $region16: #{tpu_custom_call.1} parent=11 // pred_fallthru
          _
        // Predicated region
        $region17: #{tpu_custom_call.1} parent=11 // pred_check
          %p228 = pneg %p89
        $region18: #{tpu_custom_call.1} parent=11 // pred_check_branch
          %230 = sbr.rel (%p228) target = $region20
        $region19: #{tpu_custom_call.1} parent=11 // pred_region
          _
        $region20: #{tpu_custom_call.1} parent=11 // pred_fallthru
          _
        // Predicated region
        $region21: #{tpu_custom_call.1} parent=11 // pred_check
          %p231 = pneg %p110
        $region22: #{tpu_custom_call.1} parent=11 // pred_check_branch
          %233 = sbr.rel (%p231) target = $region24
        $region23: #{tpu_custom_call.1} parent=11 // pred_region
          %235 = vsyncadd [#allocation6], 0
          %s236 = sshll.u32 %s3, 4
          %s237 = int_to_ptr.hbm [resolvable:$true] %s236
          %s238 = sshll.u32 [#allocation7], 4
          %s239 = int_to_ptr.vmem [resolvable:$true] %s238
          %244 = dma.hbm_to_vmem [thread:$0]  %s237, 512, %s239, [#allocation6], 128, 128, 8
        $region24: #{tpu_custom_call.1} parent=11 // pred_fallthru
          _
        // Predicated region
        $region25: #{tpu_custom_call.1} parent=11 // pred_check
          %p245 = pneg %p131
        $region26: #{tpu_custom_call.1} parent=11 // pred_check_branch
          %247 = sbr.rel (%p245) target = $region28
        $region27: #{tpu_custom_call.1} parent=11 // pred_region
          _
        $region28: #{tpu_custom_call.1} parent=11 // pred_fallthru
          _
        // Predicated region
        $region29: #{tpu_custom_call.1} parent=11 // pred_check
          %p248 = pneg %p152
        $region30: #{tpu_custom_call.1} parent=11 // pred_check_branch
          %250 = sbr.rel (%p248) target = $region32
        $region31: #{tpu_custom_call.1} parent=11 // pred_region
          %252 = vsyncadd [#allocation9], 0
          %s253 = sshll.u32 %s5, 4
          %s254 = int_to_ptr.hbm [resolvable:$true] %s253
          %s255 = sshll.u32 [#allocation8], 4
          %s256 = int_to_ptr.vmem [resolvable:$true] %s255
          %261 = dma.hbm_to_vmem [thread:$0]  %s254, 512, %s256, [#allocation9], 128, 128, 8
        $region32: #{tpu_custom_call.1} parent=11 // pred_fallthru
          _
        // Predicated region
        $region33: #{tpu_custom_call.1} parent=11 // pred_check
          %p262 = pneg %p173
        $region34: #{tpu_custom_call.1} parent=11 // pred_check_branch
          %264 = sbr.rel (%p262) target = $region36
        $region35: #{tpu_custom_call.1} parent=11 // pred_region
          _
        $region36: #{tpu_custom_call.1} parent=11 // pred_fallthru
          _
      $region12: #{tpu_custom_call.1} parent=5 // pred_fallthru
        _
      %p265 = scmp.lt.s32.totalorder %s21, 2
      // Predicated region
      $region37: #{tpu_custom_call.1} parent=5 // pred_check
        %p266 = pneg %p265
      $region38: #{tpu_custom_call.1} parent=5 // pred_check_branch
        %268 = sbr.rel (%p266) target = $region40
      $region39: #{tpu_custom_call.1} parent=5 // pred_region
        // Predicated region
        $region41: #{tpu_custom_call.1} parent=39 // pred_check
          %p269 = pneg %p41
        $region42: #{tpu_custom_call.1} parent=39 // pred_check_branch
          %271 = sbr.rel (%p269) target = $region44
        $region43: #{tpu_custom_call.1} parent=39 // pred_region
          %s272 = sand.u32 %s31, 1
          %s273 = scalar_lea.sflag [#allocation3], %s272
          %s274 = sand.u32 %s31, 1
          %s275 = smul.addr %s274, 8
          %s276 = scalar_lea.vmem [#allocation2], %s275
          %278 = vsyncadd %s273, 0
          %s279 = smul.addr %s21, 8
          %s280 = scalar_lea.hbm %s0, %s279
          %s282 = sshll.u32 %s280, 4
          %s283 = int_to_ptr.hbm [resolvable:$true] %s282
          %s284 = sshll.u32 %s276, 4
          %s285 = int_to_ptr.vmem [resolvable:$true] %s284
          %287 = dma.hbm_to_vmem [thread:$0]  %s283, 128, %s285, %s273
        $region44: #{tpu_custom_call.1} parent=39 // pred_fallthru
          _
      $region40: #{tpu_custom_call.1} parent=5 // pred_fallthru
        _
      %p288 = scmp.le.s32.totalorder 1, %s21
      %p289 = scmp.lt.s32.totalorder %s21, 3
      %p290 = pnand %p288, %p289
      %p291 = pneg %p290
      // Predicated region
      $region45: #{tpu_custom_call.1} parent=5 // pred_check
        _
      $region46: #{tpu_custom_call.1} parent=5 // pred_check_branch
        %293 = sbr.rel (%p290) target = $region48
      $region47: #{tpu_custom_call.1} parent=5 // pred_region
        %s294 = ssub.s32 %s21, 1
        %s295 = sand.u32 %s34, 1
        %s296 = scalar_lea.sflag [#allocation3], %s295
        %s297 = sand.u32 %s34, 1
        %s298 = smul.addr %s297, 8
        %s299 = scalar_lea.vmem [#allocation2], %s298
        // Predicated region
        $region49: #{tpu_custom_call.1} parent=47 // pred_check
          %p300 = pneg %p47
        $region50: #{tpu_custom_call.1} parent=47 // pred_check_branch
          %302 = sbr.rel (%p300) target = $region52
        $region51: #{tpu_custom_call.1} parent=47 // pred_region
          %304 = dma.done %s296, 128
        $region52: #{tpu_custom_call.1} parent=47 // pred_fallthru
          _
        // Predicated region
        $region53: #{tpu_custom_call.1} parent=47 // pred_check
          %p305 = pneg %p68
        $region54: #{tpu_custom_call.1} parent=47 // pred_check_branch
          %307 = sbr.rel (%p305) target = $region56
        $region55: #{tpu_custom_call.1} parent=47 // pred_region
          %309 = dma.done [#allocation6], 256
        $region56: #{tpu_custom_call.1} parent=47 // pred_fallthru
          _
        // Predicated region
        $region57: #{tpu_custom_call.1} parent=47 // pred_check
          %p310 = pneg %p110
        $region58: #{tpu_custom_call.1} parent=47 // pred_check_branch
          %312 = sbr.rel (%p310) target = $region60
        $region59: #{tpu_custom_call.1} parent=47 // pred_region
          %314 = dma.done [#allocation6], 512
        $region60: #{tpu_custom_call.1} parent=47 // pred_fallthru
          _
        // Predicated region
        $region61: #{tpu_custom_call.1} parent=47 // pred_check
          %p315 = pneg %p152
        $region62: #{tpu_custom_call.1} parent=47 // pred_check_branch
          %317 = sbr.rel (%p315) target = $region64
        $region63: #{tpu_custom_call.1} parent=47 // pred_region
          %319 = dma.done [#allocation9], 512
        $region64: #{tpu_custom_call.1} parent=47 // pred_fallthru
          _
        %s320 = sand.u32 %s34, 1
        %s321 = scalar_lea.sflag [#allocation3], %s320
        %s322 = sand.u32 %s34, 1
        %s323 = smul.addr %s322, 8
        %s324 = scalar_lea.vmem [#allocation2], %s323
        %p325 = pneg %p47
        %p326 = pneg %p44
        %p327 = pneg %p68
        %p328 = pneg %p65
        %p329 = pneg %p89
        %p330 = pneg %p86
        %p331 = pneg %p110
        %p332 = pneg %p107
        %p333 = pneg %p131
        %p334 = pneg %p128
        %p335 = pneg %p152
        %p336 = pneg %p149
        %p337 = pneg %p173
        %p338 = pneg %p170
        %p339 = pneg %p199
        %p340 = pneg %p196
        %s341 = sand.u32 %s186, 1
        %s342 = scalar_lea.sflag [#allocation4], %s341
        %s343 = sand.u32 %s186, 1
        %s344 = smul.addr %s343, 8
        %s345 = scalar_lea.vmem [#allocation10], %s344
        %v346 = vld [vmem:[%s299] sm:$0xff]
        %v347 = vld [vmem:[#allocation5] sm:$0xff]
        %v348 = vld [vmem:[#allocation5 + $0x8] sm:$0xff]
        %v349 = vld [vmem:[%s2] sm:$0x1]
        %v351 = vperm.slane %v349, 0
        %vm353 = vcmask 130048
        %v355 = vsel %vm353, %v346, 0
        %357 = vmatpush.msra.mxu0 0.0
        %358 = vmatpush.msra.mxu0 0.0
        %359 = vmatpush.msra.mxu0 0.0
        %360 = vmatpush.msra.mxu0 0.0
        %361 = vmatpush.msra.mxu0 0.0
        %362 = vmatpush.msra.mxu0 0.0
        %363 = vmatpush.msra.mxu0 0.0
        %364 = vmatpush.msra.mxu0 0.0
        %365 = vmatpush.msra.mxu0 0.0
        %366 = vmatpush.msra.mxu0 0.0
        %367 = vmatpush.msra.mxu0 0.0
        %368 = vmatpush.msra.mxu0 0.0
        %369 = vmatpush.msra.mxu0 0.0
        %370 = vmatpush.msra.mxu0 0.0
        %371 = vmatpush.msra.mxu0 %v348
        %372 = vmatpush.msra.mxu0 %v347
        %373 = vmatmul.f32.gmra.mxu0 %v355
        %v374 = vpop.f32.mrf.mxu0
        %v375 = vadd.f32 %v351, %v374
        %376 = vdwg.mxu0
        %v377 = vmax.f32 %v375, 0.0
        %v378 = vld [vmem:[#allocation7] sm:$0xff]
        %v379 = vld [vmem:[#allocation7 + $0x8] sm:$0xff]
        %v380 = vld [vmem:[#allocation7 + $0x10] sm:$0xff]
        %v381 = vld [vmem:[#allocation7 + $0x18] sm:$0xff]
        %v382 = vld [vmem:[%s4] sm:$0x1]
        %v384 = vperm.slane %v382, 0
        %vm386 = vcmask 261120
        %v388 = vsel %vm386, %v377, 0
        %390 = vmatpush.msra.mxu0 0.0
        %391 = vmatpush.msra.mxu0 0.0
        %392 = vmatpush.msra.mxu0 0.0
        %393 = vmatpush.msra.mxu0 0.0
        %394 = vmatpush.msra.mxu0 0.0
        %395 = vmatpush.msra.mxu0 0.0
        %396 = vmatpush.msra.mxu0 0.0
        %397 = vmatpush.msra.mxu0 0.0
        %398 = vmatpush.msra.mxu0 0.0
        %399 = vmatpush.msra.mxu0 0.0
        %400 = vmatpush.msra.mxu0 0.0
        %401 = vmatpush.msra.mxu0 0.0
        %402 = vmatpush.msra.mxu0 %v381
        %403 = vmatpush.msra.mxu0 %v380
        %404 = vmatpush.msra.mxu0 %v379
        %405 = vmatpush.msra.mxu0 %v378
        %406 = vmatmul.f32.gmra.mxu0 %v388
        %v407 = vpop.f32.mrf.mxu0
        %v408 = vadd.f32 %v384, %v407
        %409 = vdwg.mxu0
        %v410 = vmax.f32 %v408, 0.0
        %v411 = vld [vmem:[#allocation8] sm:$0xff]
        %v412 = vld [vmem:[#allocation8 + $0x8] sm:$0xff]
        %v413 = vld [vmem:[#allocation8 + $0x10] sm:$0xff]
        %v414 = vld [vmem:[#allocation8 + $0x18] sm:$0xff]
        %v415 = vld [vmem:[%s6] sm:$0x1]
        %v417 = vperm.slane %v415, 0
        %v420 = vsel %vm386, %v410, 0
        %422 = vmatpush.msra.mxu0 0.0
        %423 = vmatpush.msra.mxu0 0.0
        %424 = vmatpush.msra.mxu0 0.0
        %425 = vmatpush.msra.mxu0 0.0
        %426 = vmatpush.msra.mxu0 0.0
        %427 = vmatpush.msra.mxu0 0.0
        %428 = vmatpush.msra.mxu0 0.0
        %429 = vmatpush.msra.mxu0 0.0
        %430 = vmatpush.msra.mxu0 0.0
        %431 = vmatpush.msra.mxu0 0.0
        %432 = vmatpush.msra.mxu0 0.0
        %433 = vmatpush.msra.mxu0 0.0
        %434 = vmatpush.msra.mxu0 %v414
        %435 = vmatpush.msra.mxu0 %v413
        %436 = vmatpush.msra.mxu0 %v412
        %437 = vmatpush.msra.mxu0 %v411
        %438 = vmatmul.f32.gmra.mxu0 %v420
        %v439 = vpop.f32.mrf.mxu0
        %v440 = vadd.f32 %v417, %v439
        %441 = vdwg.mxu0
        %442 = vst [vmem:[%s345] sm:$0xff] %v440
        %s443 = sand.u32 %s186, 1
        %s444 = scalar_lea.sflag [#allocation4], %s443
        %s445 = sand.u32 %s186, 1
        %s446 = smul.addr %s445, 8
        %s447 = scalar_lea.vmem [#allocation10], %s446
        // Predicated region
        $region65: #{tpu_custom_call.1} parent=47 // pred_check
          %p448 = pneg %p196
        $region66: #{tpu_custom_call.1} parent=47 // pred_check_branch
          %450 = sbr.rel (%p448) target = $region68
        $region67: #{tpu_custom_call.1} parent=47 // pred_region
          %452 = vsyncadd %s444, 0
          %s453 = smul.addr %s26, 8
          %s454 = scalar_lea.hbm %s7, %s453
          %s456 = sshll.u32 %s447, 4
          %s457 = int_to_ptr.vmem [resolvable:$true] %s456
          %s458 = sshll.u32 %s454, 4
          %s459 = int_to_ptr.hbm [resolvable:$true] %s458
          %461 = dma.vmem_to_hbm [thread:$0]  %s457, 128, %s459, %s444
        $region68: #{tpu_custom_call.1} parent=47 // pred_fallthru
          _
      $region48: #{tpu_custom_call.1} parent=5 // pred_fallthru
        _
      %p462 = scmp.le.s32.totalorder 2, %s21
      // Predicated region
      $region69: #{tpu_custom_call.1} parent=5 // pred_check
        %p463 = pneg %p462
      $region70: #{tpu_custom_call.1} parent=5 // pred_check_branch
        %465 = sbr.rel (%p463) target = $region72
      $region71: #{tpu_custom_call.1} parent=5 // pred_region
        %s466 = ssub.s32 %s21, 2
        // Predicated region
        $region73: #{tpu_custom_call.1} parent=71 // pred_check
          %p467 = pneg %p202
        $region74: #{tpu_custom_call.1} parent=71 // pred_check_branch
          %469 = sbr.rel (%p467) target = $region76
        $region75: #{tpu_custom_call.1} parent=71 // pred_region
          %s470 = sand.u32 %s187, 1
          %s471 = scalar_lea.sflag [#allocation4], %s470
          %s472 = sand.u32 %s187, 1
          %s473 = smul.addr %s472, 8
          %s474 = scalar_lea.vmem [#allocation10], %s473
          %476 = dma.done %s471, 128
        $region76: #{tpu_custom_call.1} parent=71 // pred_fallthru
          _
      $region72: #{tpu_custom_call.1} parent=5 // pred_fallthru
        _
    $region6: #{tpu_custom_call.1} parent=1 // loop_footer
      %s25 = sadd.s32 1, %s21
    $region7: #{tpu_custom_call.1} parent=1 // loop_footer_branch
      %20 = sbr.rel target = $region3
    $region8: #{tpu_custom_call.1} parent=1 // loop_exit
      _
    %477 = vsyncpa [#allocation3], 1
    %s478 = scalar_lea.sflag [#allocation3], 1
    %479 = vsyncpa %s478, 1
    %480 = vsyncpa [#allocation6], 1
    %481 = vsyncpa [#allocation9], 1
    %482 = vsyncpa [#allocation4], 1
    %s483 = scalar_lea.sflag [#allocation4], 1
    %484 = vsyncpa %s483, 1

</llo_original>
